<compile_context>
chip_gen: v6e
topology: v6e:2x2x1
jax: 0.10.0
libtpu: 0.0.40
codegen_flags: <defaults>
</compile_context>

<pallas_src>
import functools

import jax
import jax.numpy as jnp
from jax import lax
from jax.experimental import pallas as pl
from jax.experimental.pallas import tpu as pltpu

LANE = 128
MAX_TILE_ROWS = 2048  # (2048, 128) f32 block = 1 MiB; 2 pipeline bufs + acc ~= 3 MiB VMEM


def _quant_err_kernel(inv_scale_ref, beta_ref, x_ref, out_ref, acc_ref, *,
                      Qn, Qp, n, tile_rows, blocks_per_part, full_blocks):
    p = pl.program_id(0)                 # partition (parallel / megacore axis)
    j = pl.program_id(1)                 # block within partition (reduction axis)
    gb = p * blocks_per_part + j         # global (unclamped) block index

    inv_scale = inv_scale_ref[0]
    beta = beta_ref[0]

    @pl.when(j == 0)
    def _():
        acc_ref[...] = jnp.zeros_like(acc_ref)

    def err2():
        x = x_ref[...]
        t = (x - beta) * inv_scale
        e = jnp.round(jnp.clip(t, Qn, Qp)) - t      # == (q - x) / scale
        return e * e

    # Fully-valid blocks: plain elementwise accumulate (pure VPU, no mask overhead).
    @pl.when(gb < full_blocks)
    def _():
        acc_ref[...] += err2()

    # Ragged / overshoot blocks: zero out elements whose flat index is >= n.
    @pl.when(gb >= full_blocks)
    def _():
        e2 = err2()
        row = lax.broadcasted_iota(jnp.int32, e2.shape, 0)
        lane = lax.broadcasted_iota(jnp.int32, e2.shape, 1)
        idx = (gb * tile_rows + row) * LANE + lane
        acc_ref[...] += jnp.where(idx < n, e2, 0.0)

    # One cross-lane reduce + scalar store per partition, at the last step only.
    @pl.when(j == blocks_per_part - 1)
    def _():
        out_ref[0, 0] = jnp.sum(acc_ref[...])


@functools.partial(jax.jit, static_argnums=(4, 5))
def quantization_error_pallas(x, scale, beta, g, Qn, Qp):
    """Forward pass of Quantization_error. `g` only matters for the custom backward."""
    del g  # TODO(synk): g participates only in ALSQPlus.backward (autograd), not forward.
    x_flat = x.reshape(-1).astype(jnp.float32)
    n = x_flat.shape[0]

    scale = jnp.asarray(scale, jnp.float32)
    beta_arr = jnp.asarray(beta, jnp.float32).reshape(1)
    inv_scale_arr = (1.0 / scale).reshape(1)

    rows = pl.cdiv(n, LANE)
    padded = rows * LANE
    if padded != n:
        # Tiny (<128 elem) tail pad so the flat buffer reshapes to (rows, 128);
        # padded elements are masked out inside the kernel, so the pad value is moot.
        x_flat = jnp.pad(x_flat, (0, padded - n))
    x2d = x_flat.reshape(rows, LANE)

    tile_rows = rows if rows <= MAX_TILE_ROWS else MAX_TILE_ROWS
    nblocks = pl.cdiv(rows, tile_rows)
    block_elems = tile_rows * LANE
    full_blocks = n // block_elems                 # blocks containing no invalid elements
    num_parts = 2 if nblocks >= 2 else 1           # 2 -> both TensorCores on v7x
    blocks_per_part = pl.cdiv(nblocks, num_parts)

    kernel = functools.partial(
        _quant_err_kernel, Qn=float(Qn), Qp=float(Qp), n=n, tile_rows=tile_rows,
        blocks_per_part=blocks_per_part, full_blocks=full_blocks)

    def x_index_map(p, j):
        # Clamp so we never DMA a block that starts past the array; a clamped
        # (duplicate) block is fully masked in the kernel via its flat index.
        return (jnp.minimum(p * blocks_per_part + j, nblocks - 1), 0)

    out = pl.pallas_call(
        kernel,
        out_shape=jax.ShapeDtypeStruct((num_parts, 1), jnp.float32),
        grid_spec=pltpu.PrefetchScalarGridSpec(
            num_scalar_prefetch=0,
            grid=(num_parts, blocks_per_part),
            in_specs=[
                pl.BlockSpec((1,), lambda p, j: (0,), memory_space=pltpu.SMEM),
                pl.BlockSpec((1,), lambda p, j: (0,), memory_space=pltpu.SMEM),
                pl.BlockSpec((tile_rows, LANE), x_index_map),
            ],
            out_specs=pl.BlockSpec((1, 1), lambda p, j: (p, 0),
                                   memory_space=pltpu.SMEM),
            scratch_shapes=[pltpu.VMEM((tile_rows, LANE), jnp.float32)],
        ),
        compiler_params=pltpu.CompilerParams(
            dimension_semantics=("parallel", "arbitrary"),
        ),
        cost_estimate=pl.CostEstimate(flops=8 * n, transcendentals=0,
                                      bytes_accessed=4 * n),
    )(inv_scale_arr, beta_arr, x2d)

    # sum((q - x)^2) == scale^2 * sum((round(clamp(t)) - t)^2)
    return jnp.sum(out) * scale * scale


def quantization_error_ref(x, scale, beta, g, Qn, Qp):
    del g
    x = x.astype(jnp.float32)
    q = jnp.round(jnp.clip((x - beta) / scale, Qn, Qp)) * scale + beta
    return jnp.sum((q - x) ** 2)


if __name__ == "__main__":
    key = jax.random.PRNGKey(0)

    # Module __init__ args: scale, g, Qn, Qp, beta (8-bit asymmetric range).
    Qn, Qp = -128.0, 127.0
    scale = jnp.float32(0.1)
    beta = jnp.float32(0.05)

    x = jax.random.normal(key, (2, 4, 16, 16), dtype=jnp.float32)  # NCHW activation
    g = 1.0 / float(jnp.sqrt(x.size * Qp))

    out = jax.block_until_ready(quantization_error_pallas(x, scale, beta, g, Qn, Qp))
    ref = quantization_error_ref(x, scale, beta, g, Qn, Qp)
    assert jnp.allclose(out, ref, rtol=1e-3, atol=1e-5), (out, ref)

    # Extra small shapes exercising the ragged-tail mask and the
    # multi-block / two-partition (megacore) path.
    for shape in [(3, 5, 7, 11), (4, 64, 33, 33)]:
        xi = jax.random.normal(jax.random.PRNGKey(1), shape, dtype=jnp.float32)
        gi = 1.0 / float(jnp.sqrt(xi.size * Qp))
        o = jax.block_until_ready(quantization_error_pallas(xi, scale, beta, gi, Qn, Qp))
        r = quantization_error_ref(xi, scale, beta, gi, Qn, Qp)
        assert jnp.allclose(o, r, rtol=1e-3, atol=1e-5), (shape, o, r)

    print("KERNEL_OK")
</pallas_src>

<mosaic_0001>
module attributes {stable_mosaic.version = 11 : i64} {
  func.func @_quant_err_kernel(%arg0: i32, %arg1: i32, %arg2: memref<1xf32, #tpu.memory_space<smem>>, %arg3: memref<1xf32, #tpu.memory_space<smem>>, %arg4: memref<16x128xf32, #tpu.memory_space<vmem>>, %arg5: memref<1x1xf32, #tpu.memory_space<smem>>, %arg6: memref<16x128xf32, #tpu.memory_space<vmem>>) attributes {dimension_semantics = [#tpu.dimension_semantics<parallel>, #tpu.dimension_semantics<arbitrary>], iteration_bounds = array<i64: 1, 1>, scalar_prefetch = 0 : i64, scratch_operands = 1 : i64, tpu.core_type = #tpu.core_type<tc>, window_params = [{transform_indices = @transform_0, window_bounds = array<i64: 1>}, {transform_indices = @transform_1, window_bounds = array<i64: 1>}, {transform_indices = @transform_2, window_bounds = array<i64: 16, 128>}, {transform_indices = @transform_3, window_bounds = array<i64: 1, 1>}]} {
    %c1_i32 = arith.constant 1 : i32
    %0 = arith.muli %arg0, %c1_i32 : i32
    %1 = arith.addi %0, %arg1 : i32
    %c0 = arith.constant 0 : index
    %2 = memref.load %arg2[%c0] : memref<1xf32, #tpu.memory_space<smem>>
    %c0_0 = arith.constant 0 : index
    %3 = memref.load %arg3[%c0_0] : memref<1xf32, #tpu.memory_space<smem>>
    %c0_i32 = arith.constant 0 : i32
    %4 = arith.cmpi eq, %arg1, %c0_i32 : i32
    %5 = arith.extui %4 : i1 to i32
    %c0_i32_1 = arith.constant 0 : i32
    %6 = arith.cmpi ne, %5, %c0_i32_1 : i32
    scf.if %6 {
      %cst = arith.constant 0.000000e+00 : f32
      %16 = vector.broadcast %cst : f32 to vector<16x128xf32>
      %c0_8 = arith.constant 0 : index
      %c0_9 = arith.constant 0 : index
      %17 = vector.load %arg6[%c0_8, %c0_9] : memref<16x128xf32, #tpu.memory_space<vmem>>, vector<16x128xf32>
      tpu.vector_store %arg6[%c0_8, %c0_9], %16 {strides = array<i32>} : memref<16x128xf32, #tpu.memory_space<vmem>>, vector<16x128xf32>,
    } else {
    }
    %c1_i32_2 = arith.constant 1 : i32
    %7 = arith.cmpi slt, %1, %c1_i32_2 : i32
    %8 = arith.extui %7 : i1 to i32
    %c0_i32_3 = arith.constant 0 : i32
    %9 = arith.cmpi ne, %8, %c0_i32_3 : i32
    scf.if %9 {
      %c0_8 = arith.constant 0 : index
      %c0_9 = arith.constant 0 : index
      %16 = vector.load %arg6[%c0_8, %c0_9] : memref<16x128xf32, #tpu.memory_space<vmem>>, vector<16x128xf32>
      %c0_10 = arith.constant 0 : index
      %c0_11 = arith.constant 0 : index
      %17 = vector.load %arg4[%c0_10, %c0_11] : memref<16x128xf32, #tpu.memory_space<vmem>>, vector<16x128xf32>
      %18 = vector.broadcast %3 : f32 to vector<16x128xf32>
      %19 = arith.subf %17, %18 : vector<16x128xf32>
      %20 = vector.broadcast %2 : f32 to vector<16x128xf32>
      %21 = arith.mulf %19, %20 : vector<16x128xf32>
      %cst = arith.constant -1.280000e+02 : f32
      %cst_12 = arith.constant 1.270000e+02 : f32
      %22 = vector.broadcast %cst : f32 to vector<16x128xf32>
      %23 = arith.maximumf %22, %21 : vector<16x128xf32>
      %24 = vector.broadcast %cst_12 : f32 to vector<16x128xf32>
      %25 = arith.minimumf %24, %23 : vector<16x128xf32>
      %26 = math.roundeven %25 : vector<16x128xf32>
      %27 = arith.subf %26, %21 : vector<16x128xf32>
      %28 = arith.mulf %27, %27 : vector<16x128xf32>
      %29 = arith.addf %16, %28 : vector<16x128xf32>
      %c0_13 = arith.constant 0 : index
      %c0_14 = arith.constant 0 : index
      %30 = vector.load %arg6[%c0_13, %c0_14] : memref<16x128xf32, #tpu.memory_space<vmem>>, vector<16x128xf32>
      tpu.vector_store %arg6[%c0_13, %c0_14], %29 {strides = array<i32>} : memref<16x128xf32, #tpu.memory_space<vmem>>, vector<16x128xf32>,
    } else {
    }
    %c1_i32_4 = arith.constant 1 : i32
    %10 = arith.cmpi sge, %1, %c1_i32_4 : i32
    %11 = arith.extui %10 : i1 to i32
    %c0_i32_5 = arith.constant 0 : i32
    %12 = arith.cmpi ne, %11, %c0_i32_5 : i32
    scf.if %12 {
      %c0_8 = arith.constant 0 : index
      %c0_9 = arith.constant 0 : index
      %16 = vector.load %arg4[%c0_8, %c0_9] : memref<16x128xf32, #tpu.memory_space<vmem>>, vector<16x128xf32>
      %17 = vector.broadcast %3 : f32 to vector<16x128xf32>
      %18 = arith.subf %16, %17 : vector<16x128xf32>
      %19 = vector.broadcast %2 : f32 to vector<16x128xf32>
      %20 = arith.mulf %18, %19 : vector<16x128xf32>
      %cst = arith.constant -1.280000e+02 : f32
      %cst_10 = arith.constant 1.270000e+02 : f32
      %21 = vector.broadcast %cst : f32 to vector<16x128xf32>
      %22 = arith.maximumf %21, %20 : vector<16x128xf32>
      %23 = vector.broadcast %cst_10 : f32 to vector<16x128xf32>
      %24 = arith.minimumf %23, %22 : vector<16x128xf32>
      %25 = math.roundeven %24 : vector<16x128xf32>
      %26 = arith.subf %25, %20 : vector<16x128xf32>
      %27 = arith.mulf %26, %26 : vector<16x128xf32>
      %28 = tpu.iota {dimensions = array<i32: 0>} : vector<16x128xi32>
      %29 = tpu.iota {dimensions = array<i32: 1>} : vector<16x128xi32>
      %c16_i32 = arith.constant 16 : i32
      %30 = arith.muli %1, %c16_i32 : i32
      %31 = vector.broadcast %30 : i32 to vector<16x128xi32>
      %32 = arith.addi %31, %28 : vector<16x128xi32>
      %c128_i32 = arith.constant 128 : i32
      %33 = vector.broadcast %c128_i32 : i32 to vector<16x128xi32>
      %34 = arith.muli %32, %33 : vector<16x128xi32>
      %35 = arith.addi %34, %29 : vector<16x128xi32>
      %c0_11 = arith.constant 0 : index
      %c0_12 = arith.constant 0 : index
      %36 = vector.load %arg6[%c0_11, %c0_12] : memref<16x128xf32, #tpu.memory_space<vmem>>, vector<16x128xf32>
      %c2048_i32 = arith.constant 2048 : i32
      %37 = vector.broadcast %c2048_i32 : i32 to vector<16x128xi32>
      %38 = arith.cmpi slt, %35, %37 : vector<16x128xi32>
      %cst_13 = arith.constant 0.000000e+00 : f32
      %39 = vector.broadcast %cst_13 : f32 to vector<16x128xf32>
      %40 = arith.select %38, %27, %39 : vector<16x128xi1>, vector<16x128xf32>
      %41 = arith.addf %36, %40 : vector<16x128xf32>
      %c0_14 = arith.constant 0 : index
      %c0_15 = arith.constant 0 : index
      %42 = vector.load %arg6[%c0_14, %c0_15] : memref<16x128xf32, #tpu.memory_space<vmem>>, vector<16x128xf32>
      tpu.vector_store %arg6[%c0_14, %c0_15], %41 {strides = array<i32>} : memref<16x128xf32, #tpu.memory_space<vmem>>, vector<16x128xf32>,
    } else {
    }
    %c0_i32_6 = arith.constant 0 : i32
    %13 = arith.cmpi eq, %arg1, %c0_i32_6 : i32
    %14 = arith.extui %13 : i1 to i32
    %c0_i32_7 = arith.constant 0 : i32
    %15 = arith.cmpi ne, %14, %c0_i32_7 : i32
    scf.if %15 {
      %c0_8 = arith.constant 0 : index
      %c0_9 = arith.constant 0 : index
      %16 = vector.load %arg6[%c0_8, %c0_9] : memref<16x128xf32, #tpu.memory_space<vmem>>, vector<16x128xf32>
      %17 = vector.shape_cast %16 : vector<16x128xf32> to vector<1x16x128xf32>
      %cst = arith.constant dense<0.000000e+00> : vector<1xf32>
      %18 = vector.multi_reduction <add>, %17, %cst [1, 2] : vector<1x16x128xf32> to vector<1xf32>
      %19 = vector.shape_cast %18 : vector<1xf32> to vector<1x1x1xf32>
      %20 = vector.extract %19[0, 0, 0] : f32 from vector<1x1x1xf32>
      %c0_10 = arith.constant 0 : index
      %c0_11 = arith.constant 0 : index
      %21 = memref.load %arg5[%c0_10, %c0_11] : memref<1x1xf32, #tpu.memory_space<smem>>
      memref.store %20, %arg5[%c0_10, %c0_11] : memref<1x1xf32, #tpu.memory_space<smem>>
    } else {
    }
    return
  }
  func.func @transform_0(%arg0: i32, %arg1: i32) -> i32 {
    %c0_i32 = arith.constant 0 : i32
    %c0_i32_0 = arith.constant 0 : i32
    return %c0_i32 : i32
  }
  func.func @transform_1(%arg0: i32, %arg1: i32) -> i32 {
    %c0_i32 = arith.constant 0 : i32
    %c0_i32_0 = arith.constant 0 : i32
    return %c0_i32 : i32
  }
  func.func @transform_2(%arg0: i32, %arg1: i32) -> (i32, i32) {
    %c1_i32 = arith.constant 1 : i32
    %0 = arith.muli %arg0, %c1_i32 : i32
    %1 = arith.addi %0, %arg1 : i32
    %c0_i32 = arith.constant 0 : i32
    %2 = arith.minsi %1, %c0_i32 : i32
    %c0_i32_0 = arith.constant 0 : i32
    %c0_i32_1 = arith.constant 0 : i32
    return %2, %c0_i32_0 : i32, i32
  }
  func.func @transform_3(%arg0: i32, %arg1: i32) -> (i32, i32) {
    %c0_i32 = arith.constant 0 : i32
    %c0_i32_0 = arith.constant 0 : i32
    return %arg0, %c0_i32 : i32, i32
  }
}

</mosaic_0001>

<llo_original>
// kernel: quantization_error_pallas.1
$region0: #{quantization_error_pallas.1}
  #allocation0 [shape = 'u32[]', space=smem, size = 0x4, offset = 0x4, fixed_abs, tag = 'smem constant byte address 0x4 - core index']
  #allocation1 [shape = 'u32[144,128]{1,0:T(1,128)}', space=vmem, size = 0x12000, scoped, tag = 'internal scratch']
  #allocation2 [shape = 'f32[16,128]{1,0:T(8,128)}', space=vmem, size = 0x2000, scoped, tag = 'scratch operand']
  #allocation3 [shape = 'f32[1]{0:T(128)S(6)}', space=smem, size = 0x200, scoped, tag = 'scoped memory for quantization_error_pallas.1']
  #allocation4 [shape = 'f32[1]{0:T(128)S(6)}', space=smem, size = 0x200, scoped, tag = 'scoped memory for quantization_error_pallas.1']
  %s0 = inlined_call_operand.<no memory space> [shape: f32[1], index: 0, kind: input, shape index: {}]
  %s1 = inlined_call_operand.<no memory space> [shape: f32[1], index: 1, kind: input, shape index: {}]
  %s2 = inlined_call_operand.vmem [shape: f32[16,128], index: 2, kind: input, shape index: {}]
  %s3 = inlined_call_operand.hbm [shape: f32[1,1], index: 3, kind: output, shape index: {}]
  %s4 = sld [smem:[#allocation0]]
  $region38: #{quantization_error_pallas.1} parent=0
    _
  %s6 = ssub.s32 1, %s4
  %s7 = scalar_select 0, %s6, %s4
  %8 = sst [smem:[#allocation3]] %s0
  %9 = sst [smem:[#allocation4]] %s1
  $region1: #{quantization_error_pallas.1} parent=0
    #allocation5 [shape = 'u8[512]{0}', space=smem, size = 0x200, scoped, tag = 'output window, operand 0, single buffered']
    #allocation6 [shape = 's32[1]{0}', space=sflag, size = 0x4, scoped, tag = 'scoped memory for quantization_error_pallas.1']
    %10 = vsyncpa [#allocation6], 0
    // Predicated region
    $region2: #{quantization_error_pallas.1} parent=1 // pred_check
      _
    $region3: #{quantization_error_pallas.1} parent=1 // pred_check_branch
      %12 = sbr.rel (0) target = $region5
    $region4: #{quantization_error_pallas.1} parent=1 // pred_region
      _
    $region5: #{quantization_error_pallas.1} parent=1 // pred_fallthru
      _
    // Predicated region
    $region6: #{quantization_error_pallas.1} parent=1 // pred_check
      _
    $region7: #{quantization_error_pallas.1} parent=1 // pred_check_branch
      %14 = sbr.rel (0) target = $region9
    $region8: #{quantization_error_pallas.1} parent=1 // pred_region
      _
    $region9: #{quantization_error_pallas.1} parent=1 // pred_fallthru
      _
    // Predicated region
    $region10: #{quantization_error_pallas.1} parent=1 // pred_check
      _
    $region11: #{quantization_error_pallas.1} parent=1 // pred_check_branch
      %16 = sbr.rel (0) target = $region13
    $region12: #{quantization_error_pallas.1} parent=1 // pred_region
      %s17 = sadd.s32 0, 0
      %p18 = scmp.lt.s32.totalorder %s17, 0
      %s19 = scalar_select %p18, %s17, 0
      %s20 = smul.u32 2, %s19
      %p21 = scmp.lt.s32.totalorder %s20, 1
      %s22 = scalar_select %p21, %s20, 1
      %s23 = smul.addr %s22, 8
      %s24 = scalar_lea.vmem %s2, %s23
      %s25 = sadd.s32 0, 0
      %p26 = scmp.lt.s32.totalorder %s25, 0
      %s27 = scalar_select %p26, %s25, 0
      %s28 = smul.u32 2, %s27
    $region13: #{quantization_error_pallas.1} parent=1 // pred_fallthru
      _
    %s29 = sadd.s32 0, 0
    %p30 = scmp.lt.s32.totalorder %s29, 0
    %s31 = scalar_select %p30, %s29, 0
    %s32 = smul.u32 2, %s31
    %p33 = scmp.lt.s32.totalorder %s32, 1
    %s34 = scalar_select %p33, %s32, 1
    %s35 = smul.addr %s34, 8
    %s36 = scalar_lea.vmem %s2, %s35
    %s37 = sadd.s32 0, 0
    %p38 = scmp.lt.s32.totalorder %s37, 0
    %s39 = scalar_select %p38, %s37, 0
    %s40 = smul.u32 2, %s39
    %p41 = scmp.lt.s32.totalorder %s40, 1
    %s42 = scalar_select %p41, %s40, 1
    %s43 = smul.addr %s42, 8
    %s44 = scalar_lea.vmem %s2, %s43
    %s45 = sadd.s32 0, 0
    %p46 = scmp.lt.s32.totalorder %s45, 0
    %s47 = scalar_select %p46, %s45, 0
    %s48 = smul.u32 2, %s47
    %s49 = sadd.s32 0, 0
    %s50 = sld [smem:[#allocation3]]
    %s51 = sld [smem:[#allocation4]]
    %p52 = scmp.eq.s32.totalorder 0, 0
    // Predicated region
    $region14: #{quantization_error_pallas.1} parent=1 // pred_check
      %p53 = pneg %p52
    $region15: #{quantization_error_pallas.1} parent=1 // pred_check_branch
      %55 = sbr.rel (%p53) target = $region17
    $region16: #{quantization_error_pallas.1} parent=1 // pred_region
      %56 = vst [vmem:[#allocation2] sm:$0xff] 0.0
      %57 = vst [vmem:[#allocation2 + $0x8] sm:$0xff] 0.0
    $region17: #{quantization_error_pallas.1} parent=1 // pred_fallthru
      _
    %p58 = scmp.lt.s32.totalorder %s49, 1
    // Predicated region
    $region18: #{quantization_error_pallas.1} parent=1 // pred_check
      %p59 = pneg %p58
    $region19: #{quantization_error_pallas.1} parent=1 // pred_check_branch
      %61 = sbr.rel (%p59) target = $region21
    $region20: #{quantization_error_pallas.1} parent=1 // pred_region
      %v62 = vld [vmem:[#allocation2] sm:$0xff]
      %v63 = vld [vmem:[#allocation2 + $0x8] sm:$0xff]
      %v64 = vld [vmem:[%s44] sm:$0xff]
      %v65 = vld [vmem:[%s44 + $0x8] sm:$0xff]
      %v66 = vstv %s51
      %v67 = vsub.f32 %v64, %v66
      %v68 = vsub.f32 %v65, %v66
      %v69 = vstv %s50
      %v70 = vmul.f32 %v67, %v69
      %v71 = vmul.f32 %v68, %v69
      %v72 = vmax.f32 %v70, -128.0
      %v73 = vmax.f32 %v71, -128.0
      %v74 = vmin.f32 %v72, 127.0
      %v75 = vmin.f32 %v73, 127.0
      %v76 = vround.ne.pseudo %v74
      %v77 = vround.ne.pseudo %v75
      %v78 = vsub.f32 %v76, %v70
      %v79 = vsub.f32 %v77, %v71
      %v80 = vmul.f32 %v78, %v78
      %v81 = vmul.f32 %v79, %v79
      %v82 = vadd.f32 %v62, %v80
      %v83 = vadd.f32 %v63, %v81
      %84 = vst [vmem:[#allocation2] sm:$0xff] %v82
      %85 = vst [vmem:[#allocation2 + $0x8] sm:$0xff] %v83
    $region21: #{quantization_error_pallas.1} parent=1 // pred_fallthru
      _
    %p86 = scmp.ge.s32.totalorder %s49, 1
    // Predicated region
    $region22: #{quantization_error_pallas.1} parent=1 // pred_check
      %p87 = pneg %p86
    $region23: #{quantization_error_pallas.1} parent=1 // pred_check_branch
      %89 = sbr.rel (%p87) target = $region25
    $region24: #{quantization_error_pallas.1} parent=1 // pred_region
      %v90 = vld [vmem:[%s44] sm:$0xff]
      %v91 = vld [vmem:[%s44 + $0x8] sm:$0xff]
      %v92 = vstv %s51
      %v93 = vsub.f32 %v90, %v92
      %v94 = vsub.f32 %v91, %v92
      %v95 = vstv %s50
      %v96 = vmul.f32 %v93, %v95
      %v97 = vmul.f32 %v94, %v95
      %v98 = vmax.f32 %v96, -128.0
      %v99 = vmax.f32 %v97, -128.0
      %v100 = vmin.f32 %v98, 127.0
      %v101 = vmin.f32 %v99, 127.0
      %v102 = vround.ne.pseudo %v100
      %v103 = vround.ne.pseudo %v101
      %v104 = vsub.f32 %v102, %v96
      %v105 = vsub.f32 %v103, %v97
      %v106 = vmul.f32 %v104, %v104
      %v107 = vmul.f32 %v105, %v105
      %v108 = vlaneseq
      %v109 = vshrl.u32 %v108, 7
      %v110 = vadd.s32 %v109, 8
      %v111 = vlaneseq
      %v112 = vand.u32 %v111, 127
      %s113 = smul.u32 %s49, 16
      %v114 = vstv %s113
      %v115 = vadd.s32 %v114, %v109
      %v116 = vadd.s32 %v114, %v110
      %v117 = vmul.u32 %v115, 128
      %v118 = vmul.u32 %v116, 128
      %v119 = vadd.s32 %v117, %v112
      %v120 = vadd.s32 %v118, %v112
      %v121 = vld [vmem:[#allocation2] sm:$0xff]
      %v122 = vld [vmem:[#allocation2 + $0x8] sm:$0xff]
      %vm123 = vcmp.lt.s32.totalorder %v119, 2048
      %vm124 = vcmp.lt.s32.totalorder %v120, 2048
      %v125 = vsel %vm123, %v106, 0.0
      %v126 = vsel %vm124, %v107, 0.0
      %v127 = vadd.f32 %v121, %v125
      %v128 = vadd.f32 %v122, %v126
      %129 = vst [vmem:[#allocation2] sm:$0xff] %v127
      %130 = vst [vmem:[#allocation2 + $0x8] sm:$0xff] %v128
    $region25: #{quantization_error_pallas.1} parent=1 // pred_fallthru
      _
    // Predicated region
    $region26: #{quantization_error_pallas.1} parent=1 // pred_check
      %p131 = pneg %p52
    $region27: #{quantization_error_pallas.1} parent=1 // pred_check_branch
      %133 = sbr.rel (%p131) target = $region29
    $region28: #{quantization_error_pallas.1} parent=1 // pred_region
      %v134 = vld [vmem:[#allocation2] sm:$0xff]
      %v135 = vld [vmem:[#allocation2 + $0x8] sm:$0xff]
      %v136 = vadd.f32 %v134, %v135
      %137 = vadd.xlane.f32.xlu0 %v136
      %v138 = vpop.xlane.xlu0 %137
      %v139 = vrot.slane %v138, 4
      %v140 = vadd.f32 %v138, %v139
      %v141 = vrot.slane %v140, 2
      %v142 = vadd.f32 %v140, %v141
      %v143 = vrot.slane %v142, 1
      %v144 = vadd.f32 %v142, %v143
      %s145 = vtos %v144
      %s146 = scalar_lea.smem [#allocation5], 0
      %147 = sst [smem:[%s146]] %s145
    $region29: #{quantization_error_pallas.1} parent=1 // pred_fallthru
      _
    // Predicated region
    $region30: #{quantization_error_pallas.1} parent=1 // pred_check
      _
    $region31: #{quantization_error_pallas.1} parent=1 // pred_check_branch
      %149 = sbr.rel (0) target = $region33
    $region32: #{quantization_error_pallas.1} parent=1 // pred_region
      %s151 = ssub.s32 16, 16
      %152 = vsyncadd [#allocation6], %s151
      %155 = dma.smem_to_hbm [#allocation5], 16, %s3, [#allocation6]
    $region33: #{quantization_error_pallas.1} parent=1 // pred_fallthru
      _
    // Predicated region
    $region34: #{quantization_error_pallas.1} parent=1 // pred_check
      _
    $region35: #{quantization_error_pallas.1} parent=1 // pred_check_branch
      %157 = sbr.rel (0) target = $region37
    $region36: #{quantization_error_pallas.1} parent=1 // pred_region
      %158 = dma.done [#allocation6], 16
    $region37: #{quantization_error_pallas.1} parent=1 // pred_fallthru
      _
    %159 = sfence
    %160 = vsyncpa [#allocation6], 1

</llo_original>
